<compile_context>
chip_gen: v7x
topology: tpu7x:2x2x1
jax: 0.10.0
libtpu: 0.0.40
codegen_flags: <defaults>
</compile_context>

<pallas_src>
import numpy as np
import jax
import jax.numpy as jnp
from jax.experimental import pallas as pl
from jax.experimental.pallas import tpu as pltpu

_LANE = 128


def _round_up(a, m):
    return ((a + m - 1) // m) * m


def _chomp_kernel(x_ref, o_ref):
    # 1-D tiling: x block (tr, in_t >= t_out), o block (tr, t_out) -> static
    #             slice of the leading lanes, single slab store.
    # 2-D tiling: both blocks are (tr, tc) -> the slice is an identity copy.
    o_ref[...] = x_ref[:, : o_ref.shape[-1]]


def chomp1d(x, chomp_size, *, vmem_budget_bytes=32 << 20):
    """Pallas Chomp1d: returns x[:, :, :-chomp_size].  x is (B, C, T)."""
    B, C, T = x.shape
    # NB: PyTorch x[:, :, :-0] would be empty; the TCN always constructs this
    # with chomp_size = (kernel_size - 1) * dilation > 0, so reject 0 here.
    assert 0 < chomp_size < T
    t_out = T - chomp_size

    # Flatten (B, C) -> rows (free, contiguous reshape) so each grid step
    # moves a large (rows, time) slab instead of a (1, C, T) sliver.
    R = B * C
    x2 = x.reshape(R, T)

    itemsize = x.dtype.itemsize
    sub = max(8, 32 // itemsize)  # packed sublane count: 8 f32, 16 bf16, 32 i8

    # Input block width: skip the chomped tail entirely when aligned; when
    # unaligned, round up to the lane tile (reads <= 127 extra lanes per row
    # instead of the whole chomp).
    in_t = t_out if t_out % _LANE == 0 else min(T, _round_up(t_out, _LANE))

    # ---- tile selection (VMEM-budget aware) -------------------------------
    per_row_bytes = 2 * (in_t + t_out) * itemsize  # in + out, double-buffered
    use_2d = per_row_bytes * sub > vmem_budget_bytes

    if not use_2d:
        # 1-D grid over rows, full-width blocks.
        if R <= sub:
            tr = R  # full extent (exempt from the 8-divisibility rule)
        else:
            tr_budget = max(sub, (vmem_budget_bytes // per_row_bytes) // sub * sub)
            # >= 2 row blocks so a 2-TC chip (v7x) shards the parallel axis.
            tr_half = _round_up(pl.cdiv(R, 2), sub)
            tr = min(tr_budget, tr_half)
        if tr >= R:
            tr = R
        grid = (pl.cdiv(R, tr),)
        in_specs = [pl.BlockSpec((tr, in_t), lambda r: (r, 0))]
        out_specs = pl.BlockSpec((tr, t_out), lambda r: (r, 0))
        semantics = ("parallel",)
    else:
        # Very long time axis: 2-D (row, column) tiling keeps the per-step
        # VMEM footprint fixed regardless of T.
        tc_budget = (vmem_budget_bytes // (4 * sub * itemsize)) // _LANE * _LANE
        tc = max(_LANE, min(tc_budget, _round_up(t_out, _LANE), 2048))
        tr = max(sub, (vmem_budget_bytes // (4 * tc * itemsize)) // sub * sub)
        if tr >= R:
            tr = R
        grid = (pl.cdiv(R, tr), pl.cdiv(t_out, tc))
        in_specs = [pl.BlockSpec((tr, tc), lambda r, c: (r, c))]
        out_specs = pl.BlockSpec((tr, tc), lambda r, c: (r, c))
        semantics = ("parallel", "parallel")

    out = pl.pallas_call(
        _chomp_kernel,
        out_shape=jax.ShapeDtypeStruct((R, t_out), x.dtype),
        grid=grid,
        in_specs=in_specs,
        out_specs=out_specs,
        compiler_params=pltpu.CompilerParams(
            dimension_semantics=semantics,
            # Cover the double-buffered blocks plus headroom; 48 MiB default
            # fits v7x's 64 MiB physical VMEM and lifts v5e's 16 MiB default.
            vmem_limit_bytes=int(vmem_budget_bytes + (16 << 20)),
        ),
    )(x2)

    return out.reshape(B, C, t_out)


if __name__ == "__main__":
    # Small shapes consistent with the module (NCW: batch, channels, time).
    B, C, T = 2, 4, 16
    CHOMP = 2
    key = jax.random.PRNGKey(0)
    x = jax.random.normal(key, (B, C, T), jnp.float32)

    y = chomp1d(x, CHOMP)
    jax.block_until_ready(y)
    ref = x[:, :, :-CHOMP]
    assert y.shape == (B, C, T - CHOMP)
    np.testing.assert_allclose(np.asarray(y), np.asarray(ref), rtol=0, atol=0)

    # Lane-aligned output (t_out % 128 == 0): chomped tail never DMA'd and the
    # grid splits into >= 2 row blocks (feeds both TCs on 2-TC chips).
    x2 = jax.random.normal(jax.random.PRNGKey(1), (8, 32, 384), jnp.float32)
    y2 = chomp1d(x2, 128)
    jax.block_until_ready(y2)
    np.testing.assert_allclose(np.asarray(y2), np.asarray(x2[:, :, :-128]),
                               rtol=0, atol=0)

    # Unaligned output: input width rounded up to 128 (reads 512 of 640 cols
    # instead of all 640).
    x3 = jax.random.normal(jax.random.PRNGKey(2), (8, 32, 640), jnp.float32)
    y3 = chomp1d(x3, 200)
    jax.block_until_ready(y3)
    np.testing.assert_allclose(np.asarray(y3), np.asarray(x3[:, :, :-200]),
                               rtol=0, atol=0)

    # Tiny budget forces the 2-D (row, column) tiling fallback path.
    y4 = chomp1d(x3, 200, vmem_budget_bytes=32 << 10)
    jax.block_until_ready(y4)
    np.testing.assert_allclose(np.asarray(y4), np.asarray(x3[:, :, :-200]),
                               rtol=0, atol=0)

    print("KERNEL_OK")
</pallas_src>

<mosaic_0001>
module attributes {stable_mosaic.version = 11 : i64} {
  func.func @_chomp_kernel(%arg0: i32, %arg1: memref<8x16xf32, #tpu.memory_space<vmem>>, %arg2: memref<8x14xf32, #tpu.memory_space<vmem>>) attributes {dimension_semantics = [#tpu.dimension_semantics<parallel>], iteration_bounds = array<i64: 1>, scalar_prefetch = 0 : i64, scratch_operands = 0 : i64, tpu.core_type = #tpu.core_type<tc>, window_params = [{transform_indices = @transform_0, window_bounds = array<i64: 8, 16>}, {transform_indices = @transform_1, window_bounds = array<i64: 8, 14>}]} {
    %c0 = arith.constant 0 : index
    %c0_0 = arith.constant 0 : index
    %0 = vector.load %arg1[%c0, %c0_0] : memref<8x16xf32, #tpu.memory_space<vmem>>, vector<8x14xf32>
    %c0_1 = arith.constant 0 : index
    %c0_2 = arith.constant 0 : index
    %1 = vector.load %arg2[%c0_1, %c0_2] : memref<8x14xf32, #tpu.memory_space<vmem>>, vector<8x14xf32>
    tpu.vector_store %arg2[%c0_1, %c0_2], %0 {strides = array<i32>} : memref<8x14xf32, #tpu.memory_space<vmem>>, vector<8x14xf32>,
    return
  }
  func.func @transform_0(%arg0: i32) -> (i32, i32) {
    %c0_i32 = arith.constant 0 : i32
    %c0_i32_0 = arith.constant 0 : i32
    return %arg0, %c0_i32 : i32, i32
  }
  func.func @transform_1(%arg0: i32) -> (i32, i32) {
    %c0_i32 = arith.constant 0 : i32
    %c0_i32_0 = arith.constant 0 : i32
    return %arg0, %c0_i32 : i32, i32
  }
}

</mosaic_0001>

<llo_original>
// kernel: tpu_custom_call.1
$region0: #{tpu_custom_call.1}
  #allocation0 [shape = 'u32[]', space=smem, size = 0x4, offset = 0x4, fixed_abs, tag = 'smem constant byte address 0x4 - core index']
  #allocation1 [shape = 'u32[144,128]{1,0:T(1,128)}', space=vmem, size = 0x12000, scoped, tag = 'internal scratch']
  %s0 = inlined_call_operand.hbm [shape: f32[8,16], index: 0, kind: input, shape index: {}]
  %s1 = inlined_call_operand.hbm [shape: f32[8,14], index: 1, kind: output, shape index: {}]
  %s2 = sld [smem:[#allocation0]]
  $region18: #{tpu_custom_call.1} parent=0
    _
  %s4 = ssub.s32 1, %s2
  %s5 = scalar_select 0, %s4, %s2
  $region1: #{tpu_custom_call.1} parent=0
    #allocation2 [shape = 'u8[4096]{0}', space=vmem, size = 0x1000, scoped, tag = 'input window, operand 0, single buffered']
    #allocation3 [shape = 's32[1]{0}', space=sflag, size = 0x4, scoped, tag = 'scoped memory for tpu_custom_call.1']
    #allocation4 [shape = 's32[1]{0}', space=sflag, size = 0x4, scoped, tag = 'scoped memory for tpu_custom_call.1']
    #allocation5 [shape = 'u8[4096]{0}', space=vmem, size = 0x1000, scoped, tag = 'output window, operand 0, single buffered']
    %6 = vsyncpa [#allocation3], 0
    %7 = vsyncpa [#allocation4], 0
    // Predicated region
    $region2: #{tpu_custom_call.1} parent=1 // pred_check
      _
    $region3: #{tpu_custom_call.1} parent=1 // pred_check_branch
      %9 = sbr.rel (0) target = $region5
    $region4: #{tpu_custom_call.1} parent=1 // pred_region
      %s11 = ssub.s32 128, 128
      %12 = vsyncadd [#allocation3], %s11
      %s14 = sshll.u32 [#allocation2], 4
      %s15 = int_to_ptr.vmem [resolvable:$true] %s14
      %17 = dma.hbm_to_vmem [thread:$0]  %s0, 128, %s15, [#allocation3]
    $region5: #{tpu_custom_call.1} parent=1 // pred_fallthru
      _
    // Predicated region
    $region6: #{tpu_custom_call.1} parent=1 // pred_check
      _
    $region7: #{tpu_custom_call.1} parent=1 // pred_check_branch
      %19 = sbr.rel (0) target = $region9
    $region8: #{tpu_custom_call.1} parent=1 // pred_region
      %20 = dma.done [#allocation3], 128
    $region9: #{tpu_custom_call.1} parent=1 // pred_fallthru
      _
    %v21 = vld [vmem:[#allocation2] sm:$0xff]
    %vm22 = vcmask 113664
    %23 = vst.msk [vmem:[#allocation5] sm:$0xff] %vm22, %v21
    // Predicated region
    $region10: #{tpu_custom_call.1} parent=1 // pred_check
      _
    $region11: #{tpu_custom_call.1} parent=1 // pred_check_branch
      %25 = sbr.rel (0) target = $region13
    $region12: #{tpu_custom_call.1} parent=1 // pred_region
      %s27 = ssub.s32 128, 128
      %28 = vsyncadd [#allocation4], %s27
      %s30 = sshll.u32 [#allocation5], 4
      %s31 = int_to_ptr.vmem [resolvable:$true] %s30
      %33 = dma.vmem_to_hbm [thread:$0]  %s31, 128, %s1, [#allocation4]
    $region13: #{tpu_custom_call.1} parent=1 // pred_fallthru
      _
    // Predicated region
    $region14: #{tpu_custom_call.1} parent=1 // pred_check
      _
    $region15: #{tpu_custom_call.1} parent=1 // pred_check_branch
      %35 = sbr.rel (0) target = $region17
    $region16: #{tpu_custom_call.1} parent=1 // pred_region
      %36 = dma.done [#allocation4], 128
    $region17: #{tpu_custom_call.1} parent=1 // pred_fallthru
      _
    %37 = vsyncpa [#allocation3], 1
    %38 = vsyncpa [#allocation4], 1

</llo_original>
